<compile_context>
chip_gen: v7x
topology: tpu7x:2x2x1
jax: 0.10.0
libtpu: 0.0.40
codegen_flags: <defaults>
</compile_context>

<pallas_src>
import functools

import jax
import jax.numpy as jnp
from jax.experimental import pallas as pl
from jax.experimental.pallas import tpu as pltpu

LANE = 128
STD_LANE_OFFSET = 64   # log_std head lives in lanes [64, 64+action_dim)


def _round_up(x, m):
    return (x + m - 1) // m * m


def gaussian_policy_kernel(min_log_std, max_log_std, n_hidden, *refs):
    """Fused MLP trunk + packed (mean | log_std) head."""
    obs_ref = refs[0]
    hidden_refs = refs[1:1 + 2 * n_hidden]
    wc_ref, bc_ref = refs[1 + 2 * n_hidden:1 + 2 * n_hidden + 2]
    out_ref = refs[-1]

    # f32 obs read straight from HBM, cast to bf16 for the MXU (free VPU op).
    h = obs_ref[...].astype(jnp.bfloat16)                   # (TB, obs_dim)
    for l in range(n_hidden):                                # unrolled at trace time
        w = hidden_refs[2 * l][...]                          # (in, Hp) bf16
        b = hidden_refs[2 * l + 1][...]                      # (1, Hp)  f32
        h = jnp.dot(h, w, preferred_element_type=jnp.float32) + b
        h = jnp.maximum(h, 0.0).astype(jnp.bfloat16)         # hidden_activation = relu

    # single packed head matmul: lanes [0,A) = mean pre-act, lanes [64,64+A) = log_std pre-act
    pre = jnp.dot(h, wc_ref[...], preferred_element_type=jnp.float32) + bc_ref[...]

    # sigmoid -> affine into [min_log_std, max_log_std] -> clamp, on the std lanes only
    sig = pl.reciprocal(1.0 + jnp.exp(-pre), approx=True)    # exp on EUP, recip on EUP
    log_std = min_log_std + sig * (max_log_std - min_log_std)
    log_std = jnp.clip(log_std, -10.0, 2.0)   # Gaussian.__init__ clamp on log_sigma

    lane = jax.lax.broadcasted_iota(jnp.int32, pre.shape, 1)
    out_ref[...] = jnp.where(lane >= STD_LANE_OFFSET, log_std, pre)


def gaussian_policy_forward(obs, params, *, action_dim, min_log_std, max_log_std,
                            tb=2048):
    """GaussianPolicy.forward -> (mean, log_std), each (B, action_dim) f32."""
    assert action_dim <= STD_LANE_OFFSET, "packed-head layout needs action_dim <= 64"
    # TODO(synk): for action_dim > 64 fall back to two separate 128-lane heads.

    hidden = params["hidden"]
    wc, bc = params["head"]                  # packed (Hp, 128) weight / (1, 128) bias

    B, obs_dim = obs.shape
    n_hidden = len(hidden)

    # --- batch tile selection -------------------------------------------- #
    tb = min(tb, _round_up(B, 8))
    # v7x megacore: if the whole batch fits one step and B is big enough,
    # halve the tile so dimension_semantics=("parallel",) has >= 2 steps.
    if _round_up(B, 8) <= tb and B >= 16:
        tb = _round_up(pl.cdiv(_round_up(B, 8), 2), 8)
    B_pad = _round_up(B, tb)
    if B_pad != B:
        obs = jnp.pad(obs, ((0, B_pad - B), (0, 0)))         # no dtype cast: kernel reads f32

    flat_params = [t for (w, b) in hidden for t in (w, b)] + [wc, bc]

    # obs / output tiled over batch; params VMEM-resident (constant index_map)
    in_specs = [pl.BlockSpec((tb, obs_dim), lambda i: (i, 0))]
    for p in flat_params:
        in_specs.append(pl.BlockSpec(p.shape, lambda i: (0, 0)))
    out_spec = pl.BlockSpec((tb, LANE), lambda i: (i, 0))

    mat_flops = 2 * B_pad * sum(w.shape[0] * w.shape[1] for w in flat_params[::2])
    bytes_accessed = (obs.size * obs.dtype.itemsize
                      + sum(p.size * p.dtype.itemsize for p in flat_params)
                      + B_pad * LANE * 4)

    packed = pl.pallas_call(
        functools.partial(gaussian_policy_kernel,
                          float(min_log_std), float(max_log_std), n_hidden),
        out_shape=jax.ShapeDtypeStruct((B_pad, LANE), jnp.float32),
        grid=(B_pad // tb,),
        in_specs=in_specs,
        out_specs=out_spec,
        compiler_params=pltpu.CompilerParams(
            dimension_semantics=("parallel",)),
        cost_estimate=pl.CostEstimate(
            flops=mat_flops,
            transcendentals=2 * B_pad * LANE,      # exp + reciprocal
            bytes_accessed=bytes_accessed),
    )(obs, *flat_params)

    mean = packed[:B, :action_dim]
    log_std = packed[:B, STD_LANE_OFFSET:STD_LANE_OFFSET + action_dim]
    return mean, log_std


# ----------------------------- parameters --------------------------------- #

def _fanin_init(key, in_size, out_size):
    # ptu.fanin_init on an (out, in) nn.Linear weight == U(-1/sqrt(in), 1/sqrt(in));
    # built directly in the transposed (in, out) layout the kernel consumes.
    bound = 1.0 / float(in_size) ** 0.5
    return jax.random.uniform(key, (in_size, out_size), jnp.float32, -bound, bound)


def make_params(key, obs_dim, hidden_sizes, action_dim, init_w=0.001,
                b_init_value=0.0):
    """bf16 weights / f32 biases, hidden dims padded to 128, heads packed into 128 lanes."""
    hidden = []
    in_pad, in_real = obs_dim, obs_dim
    for h in hidden_sizes:
        key, k = jax.random.split(key)
        hp = _round_up(h, LANE)
        w = jnp.zeros((in_pad, hp), jnp.float32)
        w = w.at[:in_real, :h].set(_fanin_init(k, in_real, h))
        b = jnp.zeros((1, hp), jnp.float32).at[:, :h].set(b_init_value)
        hidden.append((w.astype(jnp.bfloat16), b))
        in_pad, in_real = hp, h

    # packed head: lanes [0, A) = last_fc (mean), lanes [64, 64+A) = last_fc_log_std
    key, km, ksw, ksb = jax.random.split(key, 4)
    wc = jnp.zeros((in_pad, LANE), jnp.float32)
    wc = wc.at[:in_real, :action_dim].set(
        jax.random.uniform(km, (in_real, action_dim), jnp.float32, -init_w, init_w))
    wc = wc.at[:in_real, STD_LANE_OFFSET:STD_LANE_OFFSET + action_dim].set(
        jax.random.uniform(ksw, (in_real, action_dim), jnp.float32, -init_w, init_w))
    bc = jnp.zeros((1, LANE), jnp.float32)                   # last_fc.bias = 0
    bc = bc.at[:, STD_LANE_OFFSET:STD_LANE_OFFSET + action_dim].set(
        jax.random.uniform(ksb, (action_dim,), jnp.float32, -init_w, init_w))
    return {"hidden": hidden, "head": (wc.astype(jnp.bfloat16), bc)}


def reference_forward(obs, params, *, action_dim, min_log_std, max_log_std):
    """Plain-JAX reference with the same bf16 storage / f32 accumulation."""
    h = obs.astype(jnp.bfloat16).astype(jnp.float32)
    for w, b in params["hidden"]:
        h = jnp.maximum(h @ w.astype(jnp.float32) + b, 0.0)
        h = h.astype(jnp.bfloat16).astype(jnp.float32)
    wc, bc = params["head"]
    pre = h @ wc.astype(jnp.float32) + bc
    mean = pre[:, :action_dim]
    pre_std = pre[:, STD_LANE_OFFSET:STD_LANE_OFFSET + action_dim]
    log_std = min_log_std + (1.0 / (1.0 + jnp.exp(-pre_std))) * (max_log_std - min_log_std)
    log_std = jnp.clip(log_std, -10.0, 2.0)
    return mean, log_std


if __name__ == "__main__":
    key = jax.random.PRNGKey(0)

    batch, obs_dim, action_dim = 2, 11, 5
    hidden_sizes = (32, 32)
    min_log_std, max_log_std = -6.0, 0.0

    key, ko, kp = jax.random.split(key, 3)
    obs = jax.random.normal(ko, (batch, obs_dim), jnp.float32)
    params = make_params(kp, obs_dim, hidden_sizes, action_dim, init_w=0.001)

    mean, log_std = gaussian_policy_forward(
        obs, params, action_dim=action_dim,
        min_log_std=min_log_std, max_log_std=max_log_std, tb=2048)
    mean, log_std = jax.block_until_ready((mean, log_std))

    ref_mean, ref_log_std = reference_forward(
        obs, params, action_dim=action_dim,
        min_log_std=min_log_std, max_log_std=max_log_std)

    assert mean.shape == (batch, action_dim)
    assert log_std.shape == (batch, action_dim)
    assert bool(jnp.all(log_std >= -10.0)) and bool(jnp.all(log_std <= 2.0))
    assert jnp.allclose(mean, ref_mean, atol=1e-4, rtol=2e-2)
    # log_std tolerance loosened slightly vs an exact-divide reference because
    # the kernel uses the EUP approximate reciprocal (pl.reciprocal(approx=True)).
    assert jnp.allclose(log_std, ref_log_std, atol=1e-2, rtol=2e-2)

    # TODO(synk): the MultivariateGaussian's sample()/log_prob() methods are not
    # part of forward() and are left to the caller (plain JAX on mean/log_std).
    print("KERNEL_OK")
</pallas_src>

<mosaic_0001>
module attributes {stable_mosaic.version = 11 : i64} {
  func.func @gaussian_policy_kernel(%arg0: i32, %arg1: memref<8x11xf32, #tpu.memory_space<vmem>>, %arg2: memref<11x128xbf16, #tpu.memory_space<vmem>>, %arg3: memref<1x128xf32, #tpu.memory_space<vmem>>, %arg4: memref<128x128xbf16, #tpu.memory_space<vmem>>, %arg5: memref<1x128xf32, #tpu.memory_space<vmem>>, %arg6: memref<128x128xbf16, #tpu.memory_space<vmem>>, %arg7: memref<1x128xf32, #tpu.memory_space<vmem>>, %arg8: memref<8x128xf32, #tpu.memory_space<vmem>>) attributes {dimension_semantics = [#tpu.dimension_semantics<parallel>], iteration_bounds = array<i64: 1>, scalar_prefetch = 0 : i64, scratch_operands = 0 : i64, tpu.core_type = #tpu.core_type<tc>, window_params = [{transform_indices = @transform_0, window_bounds = array<i64: 8, 11>}, {pipeline_mode = #tpu.pipeline_mode<synchronous>, transform_indices = @transform_1, window_bounds = array<i64: 11, 128>}, {pipeline_mode = #tpu.pipeline_mode<synchronous>, transform_indices = @transform_2, window_bounds = array<i64: 1, 128>}, {pipeline_mode = #tpu.pipeline_mode<synchronous>, transform_indices = @transform_3, window_bounds = array<i64: 128, 128>}, {pipeline_mode = #tpu.pipeline_mode<synchronous>, transform_indices = @transform_4, window_bounds = array<i64: 1, 128>}, {pipeline_mode = #tpu.pipeline_mode<synchronous>, transform_indices = @transform_5, window_bounds = array<i64: 128, 128>}, {pipeline_mode = #tpu.pipeline_mode<synchronous>, transform_indices = @transform_6, window_bounds = array<i64: 1, 128>}, {transform_indices = @transform_7, window_bounds = array<i64: 8, 128>}]} {
    %c0 = arith.constant 0 : index
    %c0_0 = arith.constant 0 : index
    %0 = vector.load %arg1[%c0, %c0_0] : memref<8x11xf32, #tpu.memory_space<vmem>>, vector<8x11xf32>
    %1 = arith.truncf %0 : vector<8x11xf32> to vector<8x11xbf16>
    %c0_1 = arith.constant 0 : index
    %c0_2 = arith.constant 0 : index
    %2 = vector.load %arg2[%c0_1, %c0_2] : memref<11x128xbf16, #tpu.memory_space<vmem>>, vector<11x128xbf16>
    %c0_3 = arith.constant 0 : index
    %c0_4 = arith.constant 0 : index
    %3 = vector.load %arg3[%c0_3, %c0_4] : memref<1x128xf32, #tpu.memory_space<vmem>>, vector<1x128xf32>
    %cst = arith.constant dense<0.000000e+00> : vector<8x128xf32>
    %4 = tpu.matmul %1, %2, %cst {dimension_numbers = #tpu.dot_dimension_numbers<[1], [0], [0], [1], [0, 0, 1, 1], [], []>} : vector<8x11xbf16>, vector<11x128xbf16>, vector<8x128xf32> -> vector<8x128xf32>
    %5 = vector.broadcast %3 : vector<1x128xf32> to vector<8x128xf32>
    %6 = arith.addf %4, %5 : vector<8x128xf32>
    %cst_5 = arith.constant 0.000000e+00 : f32
    %7 = vector.broadcast %cst_5 : f32 to vector<8x128xf32>
    %8 = arith.maximumf %6, %7 : vector<8x128xf32>
    %9 = arith.truncf %8 : vector<8x128xf32> to vector<8x128xbf16>
    %c0_6 = arith.constant 0 : index
    %c0_7 = arith.constant 0 : index
    %10 = vector.load %arg4[%c0_6, %c0_7] : memref<128x128xbf16, #tpu.memory_space<vmem>>, vector<128x128xbf16>
    %c0_8 = arith.constant 0 : index
    %c0_9 = arith.constant 0 : index
    %11 = vector.load %arg5[%c0_8, %c0_9] : memref<1x128xf32, #tpu.memory_space<vmem>>, vector<1x128xf32>
    %cst_10 = arith.constant dense<0.000000e+00> : vector<8x128xf32>
    %12 = tpu.matmul %9, %10, %cst_10 {dimension_numbers = #tpu.dot_dimension_numbers<[1], [0], [0], [1], [0, 0, 1, 1], [], []>} : vector<8x128xbf16>, vector<128x128xbf16>, vector<8x128xf32> -> vector<8x128xf32>
    %13 = vector.broadcast %11 : vector<1x128xf32> to vector<8x128xf32>
    %14 = arith.addf %12, %13 : vector<8x128xf32>
    %cst_11 = arith.constant 0.000000e+00 : f32
    %15 = vector.broadcast %cst_11 : f32 to vector<8x128xf32>
    %16 = arith.maximumf %14, %15 : vector<8x128xf32>
    %17 = arith.truncf %16 : vector<8x128xf32> to vector<8x128xbf16>
    %c0_12 = arith.constant 0 : index
    %c0_13 = arith.constant 0 : index
    %18 = vector.load %arg6[%c0_12, %c0_13] : memref<128x128xbf16, #tpu.memory_space<vmem>>, vector<128x128xbf16>
    %cst_14 = arith.constant dense<0.000000e+00> : vector<8x128xf32>
    %19 = tpu.matmul %17, %18, %cst_14 {dimension_numbers = #tpu.dot_dimension_numbers<[1], [0], [0], [1], [0, 0, 1, 1], [], []>} : vector<8x128xbf16>, vector<128x128xbf16>, vector<8x128xf32> -> vector<8x128xf32>
    %c0_15 = arith.constant 0 : index
    %c0_16 = arith.constant 0 : index
    %20 = vector.load %arg7[%c0_15, %c0_16] : memref<1x128xf32, #tpu.memory_space<vmem>>, vector<1x128xf32>
    %21 = vector.broadcast %20 : vector<1x128xf32> to vector<8x128xf32>
    %22 = arith.addf %19, %21 : vector<8x128xf32>
    %cst_17 = arith.constant 0.000000e+00 : f32
    %23 = vector.broadcast %cst_17 : f32 to vector<8x128xf32>
    %24 = arith.subf %23, %22 : vector<8x128xf32>
    %25 = math.exp %24 : vector<8x128xf32>
    %cst_18 = arith.constant 1.000000e+00 : f32
    %26 = vector.broadcast %cst_18 : f32 to vector<8x128xf32>
    %27 = arith.addf %26, %25 : vector<8x128xf32>
    %28 = tpu.reciprocal %27 {approx = true} : vector<8x128xf32> -> vector<8x128xf32>
    %cst_19 = arith.constant 6.000000e+00 : f32
    %29 = vector.broadcast %cst_19 : f32 to vector<8x128xf32>
    %30 = arith.mulf %28, %29 : vector<8x128xf32>
    %cst_20 = arith.constant -6.000000e+00 : f32
    %31 = vector.broadcast %cst_20 : f32 to vector<8x128xf32>
    %32 = arith.addf %31, %30 : vector<8x128xf32>
    %cst_21 = arith.constant -1.000000e+01 : f32
    %cst_22 = arith.constant 2.000000e+00 : f32
    %33 = vector.broadcast %cst_21 : f32 to vector<8x128xf32>
    %34 = arith.maximumf %33, %32 : vector<8x128xf32>
    %35 = vector.broadcast %cst_22 : f32 to vector<8x128xf32>
    %36 = arith.minimumf %35, %34 : vector<8x128xf32>
    %37 = tpu.iota {dimensions = array<i32: 1>} : vector<8x128xi32>
    %c64_i32 = arith.constant 64 : i32
    %38 = vector.broadcast %c64_i32 : i32 to vector<8x128xi32>
    %39 = arith.cmpi sge, %37, %38 : vector<8x128xi32>
    %40 = arith.select %39, %36, %22 : vector<8x128xi1>, vector<8x128xf32>
    %c0_23 = arith.constant 0 : index
    %c0_24 = arith.constant 0 : index
    %41 = vector.load %arg8[%c0_23, %c0_24] : memref<8x128xf32, #tpu.memory_space<vmem>>, vector<8x128xf32>
    tpu.vector_store %arg8[%c0_23, %c0_24], %40 {strides = array<i32>} : memref<8x128xf32, #tpu.memory_space<vmem>>, vector<8x128xf32>,
    return
  }
  func.func @transform_0(%arg0: i32) -> (i32, i32) {
    %c0_i32 = arith.constant 0 : i32
    %c0_i32_0 = arith.constant 0 : i32
    return %arg0, %c0_i32 : i32, i32
  }
  func.func @transform_1(%arg0: i32) -> (i32, i32) {
    %c0_i32 = arith.constant 0 : i32
    %c0_i32_0 = arith.constant 0 : i32
    %c0_i32_1 = arith.constant 0 : i32
    return %c0_i32, %c0_i32_0 : i32, i32
  }
  func.func @transform_2(%arg0: i32) -> (i32, i32) {
    %c0_i32 = arith.constant 0 : i32
    %c0_i32_0 = arith.constant 0 : i32
    %c0_i32_1 = arith.constant 0 : i32
    return %c0_i32, %c0_i32_0 : i32, i32
  }
  func.func @transform_3(%arg0: i32) -> (i32, i32) {
    %c0_i32 = arith.constant 0 : i32
    %c0_i32_0 = arith.constant 0 : i32
    %c0_i32_1 = arith.constant 0 : i32
    return %c0_i32, %c0_i32_0 : i32, i32
  }
  func.func @transform_4(%arg0: i32) -> (i32, i32) {
    %c0_i32 = arith.constant 0 : i32
    %c0_i32_0 = arith.constant 0 : i32
    %c0_i32_1 = arith.constant 0 : i32
    return %c0_i32, %c0_i32_0 : i32, i32
  }
  func.func @transform_5(%arg0: i32) -> (i32, i32) {
    %c0_i32 = arith.constant 0 : i32
    %c0_i32_0 = arith.constant 0 : i32
    %c0_i32_1 = arith.constant 0 : i32
    return %c0_i32, %c0_i32_0 : i32, i32
  }
  func.func @transform_6(%arg0: i32) -> (i32, i32) {
    %c0_i32 = arith.constant 0 : i32
    %c0_i32_0 = arith.constant 0 : i32
    %c0_i32_1 = arith.constant 0 : i32
    return %c0_i32, %c0_i32_0 : i32, i32
  }
  func.func @transform_7(%arg0: i32) -> (i32, i32) {
    %c0_i32 = arith.constant 0 : i32
    %c0_i32_0 = arith.constant 0 : i32
    return %arg0, %c0_i32 : i32, i32
  }
}

</mosaic_0001>

<llo_original>
// kernel: tpu_custom_call.1
$region0: #{tpu_custom_call.1}
  #allocation0 [shape = 'u32[]', space=smem, size = 0x4, offset = 0x4, fixed_abs, tag = 'smem constant byte address 0x4 - core index']
  #allocation1 [shape = 'u32[144,128]{1,0:T(1,128)}', space=vmem, size = 0x12000, scoped, tag = 'internal scratch']
  %s0 = inlined_call_operand.hbm [shape: f32[8,11], index: 0, kind: input, shape index: {}]
  %s1 = inlined_call_operand.hbm [shape: bf16[11,128], index: 1, kind: input, shape index: {}]
  %s2 = inlined_call_operand.vmem [shape: f32[1,128], index: 2, kind: input, shape index: {}]
  %s3 = inlined_call_operand.hbm [shape: bf16[128,128], index: 3, kind: input, shape index: {}]
  %s4 = inlined_call_operand.vmem [shape: f32[1,128], index: 4, kind: input, shape index: {}]
  %s5 = inlined_call_operand.hbm [shape: bf16[128,128], index: 5, kind: input, shape index: {}]
  %s6 = inlined_call_operand.vmem [shape: f32[1,128], index: 6, kind: input, shape index: {}]
  %s7 = inlined_call_operand.hbm [shape: f32[8,128], index: 7, kind: output, shape index: {}]
  %s8 = sld [smem:[#allocation0]]
  $region54: #{tpu_custom_call.1} parent=0
    _
  %s10 = ssub.s32 1, %s8
  %s11 = scalar_select 0, %s10, %s8
  $region1: #{tpu_custom_call.1} parent=0
    #allocation2 [shape = 'u8[4096]{0}', space=vmem, size = 0x1000, scoped, tag = 'input window, operand 0, single buffered']
    #allocation3 [shape = 's32[1]{0}', space=sflag, size = 0x4, scoped, tag = 'scoped memory for tpu_custom_call.1']
    #allocation4 [shape = 's32[1]{0}', space=sflag, size = 0x4, scoped, tag = 'scoped memory for tpu_custom_call.1']
    #allocation5 [shape = 'u8[4096]{0}', space=vmem, size = 0x1000, scoped, tag = 'input window, operand 1, single buffered']
    #allocation6 [shape = 's32[1]{0}', space=sflag, size = 0x4, scoped, tag = 'scoped memory for tpu_custom_call.1']
    #allocation7 [shape = 'u8[32768]{0}', space=vmem, size = 0x8000, scoped, tag = 'input window, operand 3, single buffered']
    #allocation8 [shape = 'u8[32768]{0}', space=vmem, size = 0x8000, scoped, tag = 'input window, operand 5, single buffered']
    #allocation9 [shape = 's32[1]{0}', space=sflag, size = 0x4, scoped, tag = 'scoped memory for tpu_custom_call.1']
    #allocation10 [shape = 'u8[4096]{0}', space=vmem, size = 0x1000, scoped, tag = 'output window, operand 0, single buffered']
    %12 = vsyncpa [#allocation3], 0
    %13 = vsyncpa [#allocation6], 0
    %14 = vsyncpa [#allocation9], 0
    %15 = vsyncpa [#allocation4], 0
    // Predicated region
    $region2: #{tpu_custom_call.1} parent=1 // pred_check
      _
    $region3: #{tpu_custom_call.1} parent=1 // pred_check_branch
      %17 = sbr.rel (0) target = $region5
    $region4: #{tpu_custom_call.1} parent=1 // pred_region
      %s19 = ssub.s32 128, 128
      %20 = vsyncadd [#allocation3], %s19
      %s22 = sshll.u32 [#allocation2], 4
      %s23 = int_to_ptr.vmem [resolvable:$true] %s22
      %25 = dma.hbm_to_vmem [thread:$0]  %s0, 128, %s23, [#allocation3]
    $region5: #{tpu_custom_call.1} parent=1 // pred_fallthru
      _
    // Predicated region
    $region6: #{tpu_custom_call.1} parent=1 // pred_check
      _
    $region7: #{tpu_custom_call.1} parent=1 // pred_check_branch
      %27 = sbr.rel (0) target = $region9
    $region8: #{tpu_custom_call.1} parent=1 // pred_region
      %s29 = ssub.s32 128, 128
      %30 = vsyncadd [#allocation6], %s29
      %s31 = sshll.u32 [#allocation5], 4
      %s32 = int_to_ptr.vmem [resolvable:$true] %s31
      %37 = dma.hbm_to_vmem [thread:$0]  %s1, 128, %s32, [#allocation6], 64, 64, 4
    $region9: #{tpu_custom_call.1} parent=1 // pred_fallthru
      _
    // Predicated region
    $region10: #{tpu_custom_call.1} parent=1 // pred_check
      _
    $region11: #{tpu_custom_call.1} parent=1 // pred_check_branch
      %39 = sbr.rel (0) target = $region13
    $region12: #{tpu_custom_call.1} parent=1 // pred_region
      _
    $region13: #{tpu_custom_call.1} parent=1 // pred_fallthru
      _
    // Predicated region
    $region14: #{tpu_custom_call.1} parent=1 // pred_check
      _
    $region15: #{tpu_custom_call.1} parent=1 // pred_check_branch
      %41 = sbr.rel (0) target = $region17
    $region16: #{tpu_custom_call.1} parent=1 // pred_region
      %s43 = ssub.s32 1024, 1024
      %44 = vsyncadd [#allocation6], %s43
      %s45 = sshll.u32 [#allocation7], 4
      %s46 = int_to_ptr.vmem [resolvable:$true] %s45
      %51 = dma.hbm_to_vmem [thread:$0]  %s3, 1024, %s46, [#allocation6], 64, 64, 4
    $region17: #{tpu_custom_call.1} parent=1 // pred_fallthru
      _
    // Predicated region
    $region18: #{tpu_custom_call.1} parent=1 // pred_check
      _
    $region19: #{tpu_custom_call.1} parent=1 // pred_check_branch
      %53 = sbr.rel (0) target = $region21
    $region20: #{tpu_custom_call.1} parent=1 // pred_region
      _
    $region21: #{tpu_custom_call.1} parent=1 // pred_fallthru
      _
    // Predicated region
    $region22: #{tpu_custom_call.1} parent=1 // pred_check
      _
    $region23: #{tpu_custom_call.1} parent=1 // pred_check_branch
      %55 = sbr.rel (0) target = $region25
    $region24: #{tpu_custom_call.1} parent=1 // pred_region
      %s57 = ssub.s32 1024, 1024
      %58 = vsyncadd [#allocation9], %s57
      %s59 = sshll.u32 [#allocation8], 4
      %s60 = int_to_ptr.vmem [resolvable:$true] %s59
      %65 = dma.hbm_to_vmem [thread:$0]  %s5, 1024, %s60, [#allocation9], 64, 64, 4
    $region25: #{tpu_custom_call.1} parent=1 // pred_fallthru
      _
    // Predicated region
    $region26: #{tpu_custom_call.1} parent=1 // pred_check
      _
    $region27: #{tpu_custom_call.1} parent=1 // pred_check_branch
      %67 = sbr.rel (0) target = $region29
    $region28: #{tpu_custom_call.1} parent=1 // pred_region
      _
    $region29: #{tpu_custom_call.1} parent=1 // pred_fallthru
      _
    // Predicated region
    $region30: #{tpu_custom_call.1} parent=1 // pred_check
      _
    $region31: #{tpu_custom_call.1} parent=1 // pred_check_branch
      %69 = sbr.rel (0) target = $region33
    $region32: #{tpu_custom_call.1} parent=1 // pred_region
      %70 = dma.done [#allocation3], 128
    $region33: #{tpu_custom_call.1} parent=1 // pred_fallthru
      _
    // Predicated region
    $region34: #{tpu_custom_call.1} parent=1 // pred_check
      _
    $region35: #{tpu_custom_call.1} parent=1 // pred_check_branch
      %72 = sbr.rel (0) target = $region37
    $region36: #{tpu_custom_call.1} parent=1 // pred_region
      %73 = dma.done [#allocation6], 128
    $region37: #{tpu_custom_call.1} parent=1 // pred_fallthru
      _
    // Predicated region
    $region38: #{tpu_custom_call.1} parent=1 // pred_check
      _
    $region39: #{tpu_custom_call.1} parent=1 // pred_check_branch
      %75 = sbr.rel (0) target = $region41
    $region40: #{tpu_custom_call.1} parent=1 // pred_region
      %76 = dma.done [#allocation6], 1024
    $region41: #{tpu_custom_call.1} parent=1 // pred_fallthru
      _
    // Predicated region
    $region42: #{tpu_custom_call.1} parent=1 // pred_check
      _
    $region43: #{tpu_custom_call.1} parent=1 // pred_check_branch
      %78 = sbr.rel (0) target = $region45
    $region44: #{tpu_custom_call.1} parent=1 // pred_region
      %79 = dma.done [#allocation9], 1024
    $region45: #{tpu_custom_call.1} parent=1 // pred_fallthru
      _
    %v81 = vld [vmem:[#allocation2] sm:$0xff]
    %v82 = vpack.c.bf16 %v81, %v81
    %v83 = vld [vmem:[#allocation5] sm:$0xf]
    %v84 = vld [vmem:[#allocation5 + $0x4] sm:$0x3]
    %v85 = vld [vmem:[%s2] sm:$0x1]
    %v87 = vlaneseq
    %v88 = vshrl.u32 %v87, 7
    %v89 = vsub.s32 0, %v88
    %v90 = vrot.slane %v85, %v89
    %v94 = vunpack.c.l.b16 %v83
    %v95 = vunpack.c.l.b16 %v84
    %v96 = vpack.c.b16 %v95, %v94
    %vm97 = vcmask 89088
    %v99 = vsel %vm97, %v82, 0
    %vm101 = vcmask 1044480
    %vm102 = vcmask 1045504
    %v103 = vsel %vm101, 4294967295, 65535
    %v104 = vsel %vm102, %v103, 0
    %v106 = vand.u32 %v96, %v104
    %108 = vmatprep.subr.bf16.mxu0 0
    %109 = vmatpush1.bf16.msra.mxu0 %v106
    %110 = vmatprep.subr.bf16.mxu0 0
    %111 = vmatpush1.bf16.msra.mxu0 0
    %112 = vmatprep.subr.bf16.mxu0 0
    %113 = vmatpush1.bf16.msra.mxu0 0
    %114 = vmatprep.subr.bf16.mxu0 0
    %115 = vmatpush1.bf16.msra.mxu0 0
    %116 = vmatprep.subr.bf16.mxu0 0
    %117 = vmatpush1.bf16.msra.mxu0 0
    %118 = vmatprep.subr.bf16.mxu0 0
    %119 = vmatpush1.bf16.msra.mxu0 0
    %120 = vmatprep.subr.bf16.mxu0 0
    %121 = vmatpush1.bf16.msra.mxu0 0
    %122 = vmatprep.subr.bf16.mxu0 0
    %123 = vmatpush1.bf16.msra.mxu0 0
    %124 = vmatprep.subr.bf16.mxu0 0
    %125 = vmatpush1.bf16.msra.mxu0 0
    %126 = vmatprep.subr.bf16.mxu0 0
    %127 = vmatpush1.bf16.msra.mxu0 0
    %128 = vmatprep.subr.bf16.mxu0 0
    %129 = vmatpush1.bf16.msra.mxu0 0
    %130 = vmatprep.subr.bf16.mxu0 0
    %131 = vmatpush1.bf16.msra.mxu0 0
    %132 = vmatprep.subr.bf16.mxu0 0
    %133 = vmatpush1.bf16.msra.mxu0 0
    %134 = vmatprep.subr.bf16.mxu0 0
    %135 = vmatpush1.bf16.msra.mxu0 0
    %136 = vmatprep.subr.bf16.mxu0 0
    %137 = vmatpush1.bf16.msra.mxu0 0
    %138 = vmatprep.subr.bf16.mxu0 0
    %139 = vmatpush1.bf16.msra.mxu0 0
    %140 = vmatprep.mubr.bf16.mxu0 0
    %141 = vmatmul.mubr.bf16.gmra.mrb[0].mxu0 %v99
    %v142 = vpop.f32.mrb[0].mxu0
    %v143 = vadd.f32 %v90, %v142
    %v144 = vpop.f32.mrb[0].mxu0
    %v145 = vpop.f32.mrb[0].mxu0
    %v146 = vpop.f32.mrb[0].mxu0
    %147 = vdwg.mxu0
    %v148 = vmax.f32 %v143, 0.0
    %v149 = vpack.c.bf16 %v148, %v148
    %v150 = vld [vmem:[#allocation7] sm:$0xf]
    %v151 = vld [vmem:[#allocation7 + $0x4] sm:$0xf]
    %v152 = vld [vmem:[#allocation7 + $0x8] sm:$0xf]
    %v153 = vld [vmem:[#allocation7 + $0xc] sm:$0xf]
    %v154 = vld [vmem:[#allocation7 + $0x10] sm:$0xf]
    %v155 = vld [vmem:[#allocation7 + $0x14] sm:$0xf]
    %v156 = vld [vmem:[#allocation7 + $0x18] sm:$0xf]
    %v157 = vld [vmem:[#allocation7 + $0x1c] sm:$0xf]
    %v158 = vld [vmem:[#allocation7 + $0x20] sm:$0xf]
    %v159 = vld [vmem:[#allocation7 + $0x24] sm:$0xf]
    %v160 = vld [vmem:[#allocation7 + $0x28] sm:$0xf]
    %v161 = vld [vmem:[#allocation7 + $0x2c] sm:$0xf]
    %v162 = vld [vmem:[#allocation7 + $0x30] sm:$0xf]
    %v163 = vld [vmem:[#allocation7 + $0x34] sm:$0xf]
    %v164 = vld [vmem:[#allocation7 + $0x38] sm:$0xf]
    %v165 = vld [vmem:[#allocation7 + $0x3c] sm:$0xf]
    %v166 = vld [vmem:[%s4] sm:$0x1]
    %v168 = vlaneseq
    %v169 = vshrl.u32 %v168, 7
    %v170 = vsub.s32 0, %v169
    %v171 = vrot.slane %v166, %v170
    %v189 = vunpack.c.l.b16 %v150
    %v190 = vunpack.c.l.b16 %v151
    %v191 = vunpack.c.l.b16 %v152
    %v192 = vunpack.c.l.b16 %v153
    %v193 = vunpack.c.l.b16 %v154
    %v194 = vunpack.c.l.b16 %v155
    %v195 = vunpack.c.l.b16 %v156
    %v196 = vunpack.c.l.b16 %v157
    %v197 = vunpack.c.l.b16 %v158
    %v198 = vunpack.c.l.b16 %v159
    %v199 = vunpack.c.l.b16 %v160
    %v200 = vunpack.c.l.b16 %v161
    %v201 = vunpack.c.l.b16 %v162
    %v202 = vunpack.c.l.b16 %v163
    %v203 = vunpack.c.l.b16 %v164
    %v204 = vunpack.c.l.b16 %v165
    %v205 = vpack.c.b16 %v190, %v189
    %v206 = vpack.c.b16 %v192, %v191
    %v207 = vpack.c.b16 %v194, %v193
    %v208 = vpack.c.b16 %v196, %v195
    %v209 = vpack.c.b16 %v198, %v197
    %v210 = vpack.c.b16 %v200, %v199
    %v211 = vpack.c.b16 %v202, %v201
    %v212 = vpack.c.b16 %v204, %v203
    %221 = vmatprep.subr.bf16.mxu0 0
    %222 = vmatpush1.bf16.msra.mxu0 %v205
    %223 = vmatprep.subr.bf16.mxu0 0
    %224 = vmatpush1.bf16.msra.mxu0 %v206
    %225 = vmatprep.subr.bf16.mxu0 0
    %226 = vmatpush1.bf16.msra.mxu0 %v207
    %227 = vmatprep.subr.bf16.mxu0 0
    %228 = vmatpush1.bf16.msra.mxu0 %v208
    %229 = vmatprep.subr.bf16.mxu0 0
    %230 = vmatpush1.bf16.msra.mxu0 %v209
    %231 = vmatprep.subr.bf16.mxu0 0
    %232 = vmatpush1.bf16.msra.mxu0 %v210
    %233 = vmatprep.subr.bf16.mxu0 0
    %234 = vmatpush1.bf16.msra.mxu0 %v211
    %235 = vmatprep.subr.bf16.mxu0 0
    %236 = vmatpush1.bf16.msra.mxu0 %v212
    %237 = vmatprep.subr.bf16.mxu0 0
    %238 = vmatpush1.bf16.msra.mxu0 0
    %239 = vmatprep.subr.bf16.mxu0 0
    %240 = vmatpush1.bf16.msra.mxu0 0
    %241 = vmatprep.subr.bf16.mxu0 0
    %242 = vmatpush1.bf16.msra.mxu0 0
    %243 = vmatprep.subr.bf16.mxu0 0
    %244 = vmatpush1.bf16.msra.mxu0 0
    %245 = vmatprep.subr.bf16.mxu0 0
    %246 = vmatpush1.bf16.msra.mxu0 0
    %247 = vmatprep.subr.bf16.mxu0 0
    %248 = vmatpush1.bf16.msra.mxu0 0
    %249 = vmatprep.subr.bf16.mxu0 0
    %250 = vmatpush1.bf16.msra.mxu0 0
    %251 = vmatprep.subr.bf16.mxu0 0
    %252 = vmatpush1.bf16.msra.mxu0 0
    %253 = vmatprep.mubr.bf16.mxu0 0
    %254 = vmatmul.mubr.bf16.gmra.mrb[0].mxu0 %v149
    %v255 = vpop.f32.mrb[0].mxu0
    %v256 = vadd.f32 %v171, %v255
    %v257 = vpop.f32.mrb[0].mxu0
    %v258 = vpop.f32.mrb[0].mxu0
    %v259 = vpop.f32.mrb[0].mxu0
    %260 = vdwg.mxu0
    %v261 = vmax.f32 %v256, 0.0
    %v262 = vpack.c.bf16 %v261, %v261
    %v263 = vld [vmem:[#allocation8] sm:$0xf]
    %v264 = vld [vmem:[#allocation8 + $0x4] sm:$0xf]
    %v265 = vld [vmem:[#allocation8 + $0x8] sm:$0xf]
    %v266 = vld [vmem:[#allocation8 + $0xc] sm:$0xf]
    %v267 = vld [vmem:[#allocation8 + $0x10] sm:$0xf]
    %v268 = vld [vmem:[#allocation8 + $0x14] sm:$0xf]
    %v269 = vld [vmem:[#allocation8 + $0x18] sm:$0xf]
    %v270 = vld [vmem:[#allocation8 + $0x1c] sm:$0xf]
    %v271 = vld [vmem:[#allocation8 + $0x20] sm:$0xf]
    %v272 = vld [vmem:[#allocation8 + $0x24] sm:$0xf]
    %v273 = vld [vmem:[#allocation8 + $0x28] sm:$0xf]
    %v274 = vld [vmem:[#allocation8 + $0x2c] sm:$0xf]
    %v275 = vld [vmem:[#allocation8 + $0x30] sm:$0xf]
    %v276 = vld [vmem:[#allocation8 + $0x34] sm:$0xf]
    %v277 = vld [vmem:[#allocation8 + $0x38] sm:$0xf]
    %v278 = vld [vmem:[#allocation8 + $0x3c] sm:$0xf]
    %v279 = vld [vmem:[%s6] sm:$0x1]
    %v281 = vlaneseq
    %v282 = vshrl.u32 %v281, 7
    %v283 = vsub.s32 0, %v282
    %v284 = vrot.slane %v279, %v283
    %v302 = vunpack.c.l.b16 %v263
    %v303 = vunpack.c.l.b16 %v264
    %v304 = vunpack.c.l.b16 %v265
    %v305 = vunpack.c.l.b16 %v266
    %v306 = vunpack.c.l.b16 %v267
    %v307 = vunpack.c.l.b16 %v268
    %v308 = vunpack.c.l.b16 %v269
    %v309 = vunpack.c.l.b16 %v270
    %v310 = vunpack.c.l.b16 %v271
    %v311 = vunpack.c.l.b16 %v272
    %v312 = vunpack.c.l.b16 %v273
    %v313 = vunpack.c.l.b16 %v274
    %v314 = vunpack.c.l.b16 %v275
    %v315 = vunpack.c.l.b16 %v276
    %v316 = vunpack.c.l.b16 %v277
    %v317 = vunpack.c.l.b16 %v278
    %v318 = vpack.c.b16 %v303, %v302
    %v319 = vpack.c.b16 %v305, %v304
    %v320 = vpack.c.b16 %v307, %v306
    %v321 = vpack.c.b16 %v309, %v308
    %v322 = vpack.c.b16 %v311, %v310
    %v323 = vpack.c.b16 %v313, %v312
    %v324 = vpack.c.b16 %v315, %v314
    %v325 = vpack.c.b16 %v317, %v316
    %334 = vmatprep.subr.bf16.mxu0 0
    %335 = vmatpush1.bf16.msra.mxu0 %v318
    %336 = vmatprep.subr.bf16.mxu0 0
    %337 = vmatpush1.bf16.msra.mxu0 %v319
    %338 = vmatprep.subr.bf16.mxu0 0
    %339 = vmatpush1.bf16.msra.mxu0 %v320
    %340 = vmatprep.subr.bf16.mxu0 0
    %341 = vmatpush1.bf16.msra.mxu0 %v321
    %342 = vmatprep.subr.bf16.mxu0 0
    %343 = vmatpush1.bf16.msra.mxu0 %v322
    %344 = vmatprep.subr.bf16.mxu0 0
    %345 = vmatpush1.bf16.msra.mxu0 %v323
    %346 = vmatprep.subr.bf16.mxu0 0
    %347 = vmatpush1.bf16.msra.mxu0 %v324
    %348 = vmatprep.subr.bf16.mxu0 0
    %349 = vmatpush1.bf16.msra.mxu0 %v325
    %350 = vmatprep.subr.bf16.mxu0 0
    %351 = vmatpush1.bf16.msra.mxu0 0
    %352 = vmatprep.subr.bf16.mxu0 0
    %353 = vmatpush1.bf16.msra.mxu0 0
    %354 = vmatprep.subr.bf16.mxu0 0
    %355 = vmatpush1.bf16.msra.mxu0 0
    %356 = vmatprep.subr.bf16.mxu0 0
    %357 = vmatpush1.bf16.msra.mxu0 0
    %358 = vmatprep.subr.bf16.mxu0 0
    %359 = vmatpush1.bf16.msra.mxu0 0
    %360 = vmatprep.subr.bf16.mxu0 0
    %361 = vmatpush1.bf16.msra.mxu0 0
    %362 = vmatprep.subr.bf16.mxu0 0
    %363 = vmatpush1.bf16.msra.mxu0 0
    %364 = vmatprep.subr.bf16.mxu0 0
    %365 = vmatpush1.bf16.msra.mxu0 0
    %366 = vmatprep.mubr.bf16.mxu0 0
    %367 = vmatmul.mubr.bf16.gmra.mrb[0].mxu0 %v262
    %v368 = vpop.f32.mrb[0].mxu0
    %v369 = vadd.f32 %v284, %v368
    %v370 = vpop.f32.mrb[0].mxu0
    %v371 = vpop.f32.mrb[0].mxu0
    %v372 = vpop.f32.mrb[0].mxu0
    %373 = vdwg.mxu0
    %v374 = vsub.f32 0.0, %v369
    %v375 = vmul.f32 %v374, 1.442695
    %v376 = vpow.pop %v375
    %v377 = vadd.f32 %v376, 1.0
    %v378 = vrcp.pop %v377
    %v379 = vmul.f32 %v378, 6.0
    %v380 = vadd.f32 %v379, -6.0
    %v381 = vmax.f32 %v380, -10.0
    %v382 = vmin.f32 %v381, 2.0
    %v383 = vlaneseq
    %v384 = vand.u32 %v383, 127
    %vm385 = vcmp.ge.s32.totalorder %v384, 64
    %v386 = vsel %vm385, %v382, %v369
    %387 = vst [vmem:[#allocation10] sm:$0xff] %v386
    // Predicated region
    $region46: #{tpu_custom_call.1} parent=1 // pred_check
      _
    $region47: #{tpu_custom_call.1} parent=1 // pred_check_branch
      %389 = sbr.rel (0) target = $region49
    $region48: #{tpu_custom_call.1} parent=1 // pred_region
      %s391 = ssub.s32 128, 128
      %392 = vsyncadd [#allocation4], %s391
      %s394 = sshll.u32 [#allocation10], 4
      %s395 = int_to_ptr.vmem [resolvable:$true] %s394
      %397 = dma.vmem_to_hbm [thread:$0]  %s395, 128, %s7, [#allocation4]
    $region49: #{tpu_custom_call.1} parent=1 // pred_fallthru
      _
    // Predicated region
    $region50: #{tpu_custom_call.1} parent=1 // pred_check
      _
    $region51: #{tpu_custom_call.1} parent=1 // pred_check_branch
      %399 = sbr.rel (0) target = $region53
    $region52: #{tpu_custom_call.1} parent=1 // pred_region
      %400 = dma.done [#allocation4], 128
    $region53: #{tpu_custom_call.1} parent=1 // pred_fallthru
      _
    %401 = vsyncpa [#allocation3], 1
    %402 = vsyncpa [#allocation6], 1
    %403 = vsyncpa [#allocation9], 1
    %404 = vsyncpa [#allocation4], 1

</llo_original>
